<compile_context>
chip_gen: v7x
topology: tpu7x:2x2x1
jax: 0.10.0
libtpu: 0.0.40
codegen_flags: <defaults>
</compile_context>

<pallas_src>
import functools

import jax
import jax.numpy as jnp
from jax.experimental import pallas as pl
from jax.experimental.pallas import tpu as pltpu

_LANE = 128


def _landmark_head_kernel(w_ref, x_ref, b_ref, o_ref, *, compute_dtype):
    # w_ref: (Cout, Cin)     full weight, already in compute dtype
    # x_ref: (1, Cin, t_hw)  activation tile in native NCHW layout, native dtype
    # b_ref: (Cout, 1)       bias, f32
    # o_ref: (1, Cout, t_hw) output tile (lane-dense last dim)
    x = x_ref[0]
    if x.dtype != compute_dtype:
        # Per-tile cast (VPU) -- avoids a separate HBM pass in the wrapper.
        x = x.astype(compute_dtype)
    acc = jnp.dot(w_ref[...], x, preferred_element_type=jnp.float32)
    o_ref[0] = (acc + b_ref[...]).astype(o_ref.dtype)


def _floor_lane(v):
    return max(_LANE, (v // _LANE) * _LANE)


def landmark_head(x_nchw, weight, bias, num_anchors=3, *,
                  tile_hw=8192,
                  compute_dtype=None,
                  vmem_tile_budget_bytes=24 << 20,
                  min_grid_points=4,
                  permute_output=True):
    """Forward pass of RetinaFace LandmarkHead (1x1 conv + permute + view).

    x_nchw : (N, Cin, H, W)     activation, PyTorch NCHW layout
    weight : (Cout, Cin, 1, 1)  1x1 conv weight, Cout = num_anchors*8
    bias   : (Cout,)            conv bias
    tile_hw: requested pixels per grid step along H*W (128-aligned, capped by
             the VMEM budget and by H*W; tail tiles are masked by Pallas).
    compute_dtype: dtype of the MXU operands (defaults to x.dtype).  bf16 is
             recommended on v5e/v6e/v7x alike; accumulation and the bias add
             stay f32.  Note: passing compute_dtype=bf16 with an f32 input
             quantizes activations+weights (not bit-exact vs the f32 PyTorch
             head) and only saves MXU time -- to also halve activation HBM
             traffic, feed bf16 activations from upstream.
    permute_output: True  -> (N, H*W*num_anchors, 8)   [module semantics]
                    False -> (N, Cout, H*W)            [review item 6, option A:
                             skips the post-kernel permute HBM pass]
    """
    N, Cin, H, W = x_nchw.shape
    Cout = weight.shape[0]
    assert Cout == num_anchors * 8, "Cout must equal num_anchors * 8"
    HW = H * W

    out_dtype = x_nchw.dtype
    compute_dtype = jnp.dtype(compute_dtype or x_nchw.dtype)

    # Free reshapes; NO transpose and NO cast of the big activation.
    x_flat = x_nchw.reshape(N, Cin, HW)                         # (N, Cin, HW)
    w_mat = weight.reshape(Cout, Cin).astype(compute_dtype)     # (Cout, Cin)
    b_col = bias.reshape(Cout, 1).astype(jnp.float32)           # (Cout, 1)

    in_b = jnp.dtype(x_nchw.dtype).itemsize      # what is actually DMA'd
    out_b = jnp.dtype(out_dtype).itemsize
    w_b = jnp.dtype(compute_dtype).itemsize

    # ---- HW tile selection -------------------------------------------------
    # Double-buffered input + output bytes per pixel of tile.
    per_px = 2 * (Cin * in_b + Cout * out_b)
    budget_px = max(_LANE, vmem_tile_budget_bytes // per_px)

    if HW <= _LANE:
        t_hw = HW                                   # full dim: always legal
    else:
        t_hw = _floor_lane(min(tile_hw, budget_px, HW))
        # Occupancy: make sure the grid has enough steps for megacore/v7x.
        if N * pl.cdiv(HW, t_hw) < min_grid_points:
            want_tiles = min(-(-min_grid_points // N), pl.cdiv(HW, _LANE))
            t_hw = min(t_hw, _floor_lane(-(-HW // want_tiles)))
        if t_hw >= HW:
            t_hw = HW
    n_hw = pl.cdiv(HW, t_hw)
    grid = (N, n_hw)

    # ---- VMEM limit matched to the chosen tile -----------------------------
    tile_bytes = 2 * t_hw * (Cin * in_b + Cout * out_b)
    const_bytes = 2 * (Cout * Cin * w_b + Cout * 4)
    vmem_limit = int(min(max(tile_bytes + const_bytes + (4 << 20), 16 << 20),
                         48 << 20))

    cost = pl.CostEstimate(
        flops=2 * N * HW * Cin * Cout,
        transcendentals=0,
        bytes_accessed=(N * HW * Cin * in_b          # activation read
                        + N * HW * Cout * out_b      # output write
                        + Cout * Cin * w_b           # weight
                        + Cout * 4),                 # bias
    )

    kernel = functools.partial(_landmark_head_kernel,
                               compute_dtype=compute_dtype)

    out_cohw = pl.pallas_call(
        kernel,
        out_shape=jax.ShapeDtypeStruct((N, Cout, HW), out_dtype),
        grid_spec=pltpu.PrefetchScalarGridSpec(
            num_scalar_prefetch=0,
            grid=grid,
            in_specs=[
                pl.BlockSpec((Cout, Cin), lambda n, j: (0, 0)),        # weight
                pl.BlockSpec((1, Cin, t_hw), lambda n, j: (n, 0, j)),  # x tile
                pl.BlockSpec((Cout, 1), lambda n, j: (0, 0)),          # bias
            ],
            out_specs=pl.BlockSpec((1, Cout, t_hw), lambda n, j: (n, 0, j)),
        ),
        compiler_params=pltpu.CompilerParams(
            dimension_semantics=("parallel", "parallel"),
            vmem_limit_bytes=vmem_limit),
        cost_estimate=cost,
    )(w_mat, x_flat, b_col)

    if not permute_output:
        # Review item 6, option A: channel-major result, no extra HBM pass.
        return out_cohw

    # Small-result glue (Cout << Cin): (N,Cout,HW) -> (N,HW,Cout) -> (N,HW*A,8)
    return jnp.transpose(out_cohw, (0, 2, 1)).reshape(N, HW * num_anchors, 8)


def _reference(x_nchw, weight, bias, num_anchors):
    """Plain-JAX reference with the PyTorch permute+view semantics."""
    N, Cin, H, W = x_nchw.shape
    Cout = weight.shape[0]
    y = jnp.einsum("nchw,oc->nhwo",
                   x_nchw.astype(jnp.float32),
                   weight.reshape(Cout, Cin).astype(jnp.float32))
    y = y + bias.astype(jnp.float32)
    return y.reshape(N, H * W * num_anchors, 8)


if __name__ == "__main__":
    num_anchors = 3
    Cout = num_anchors * 8

    key = jax.random.PRNGKey(0)
    kx, kw, kb, kx2 = jax.random.split(key, 4)

    # --- Test 1: f32, HW=256 -> occupancy split gives a (2,2) grid ---------
    N, Cin, H, W = 2, 32, 16, 16
    x = jax.random.normal(kx, (N, Cin, H, W), dtype=jnp.float32)
    weight = jax.random.normal(kw, (Cout, Cin, 1, 1), dtype=jnp.float32) * 0.05
    bias = jax.random.normal(kb, (Cout,), dtype=jnp.float32) * 0.05

    out = jax.block_until_ready(landmark_head(x, weight, bias, num_anchors))
    ref = _reference(x, weight, bias, num_anchors)
    assert out.shape == (N, H * W * num_anchors, 8)
    assert jnp.allclose(out, ref, atol=1e-4, rtol=1e-4), "f32 mismatch"

    # --- Test 2: bf16-native activation (recommended prod path on all gens),
    #             ragged HW=400 -> masked tail tile -------------------------
    N2, H2, W2 = 2, 20, 20
    x2 = jax.random.normal(kx2, (N2, Cin, H2, W2),
                           dtype=jnp.float32).astype(jnp.bfloat16)
    out2 = jax.block_until_ready(landmark_head(x2, weight, bias, num_anchors))
    ref2 = _reference(x2.astype(jnp.float32),
                      weight.astype(jnp.bfloat16).astype(jnp.float32),
                      bias, num_anchors)
    assert out2.shape == (N2, H2 * W2 * num_anchors, 8)
    assert jnp.allclose(out2.astype(jnp.float32), ref2,
                        atol=2e-2, rtol=2e-2), "bf16 mismatch"

    # --- Test 3: f32 input with in-kernel bf16 cast (no wrapper HBM pass) --
    out3 = jax.block_until_ready(
        landmark_head(x, weight, bias, num_anchors,
                      compute_dtype=jnp.bfloat16))
    ref3 = _reference(x.astype(jnp.bfloat16).astype(jnp.float32),
                      weight.astype(jnp.bfloat16).astype(jnp.float32),
                      bias, num_anchors)
    assert jnp.allclose(out3, ref3, atol=2e-2, rtol=2e-2), "cast-path mismatch"

    # --- Test 4: Option-A layout (skip the post-kernel permute) ------------
    out4 = jax.block_until_ready(
        landmark_head(x, weight, bias, num_anchors, permute_output=False))
    ref4 = jnp.transpose(ref.reshape(N, H * W, Cout), (0, 2, 1))
    assert out4.shape == (N, Cout, H * W)
    assert jnp.allclose(out4, ref4, atol=1e-4, rtol=1e-4), "layout mismatch"

    print("KERNEL_OK")
</pallas_src>

<mosaic_0001>
module attributes {stable_mosaic.version = 11 : i64} {
  func.func @_landmark_head_kernel(%arg0: i32, %arg1: i32, %arg2: memref<24x32xf32, #tpu.memory_space<vmem>>, %arg3: memref<1x32x128xf32, #tpu.memory_space<vmem>>, %arg4: memref<24x1xf32, #tpu.memory_space<vmem>>, %arg5: memref<1x24x128xf32, #tpu.memory_space<vmem>>) attributes {dimension_semantics = [#tpu.dimension_semantics<parallel>, #tpu.dimension_semantics<parallel>], iteration_bounds = array<i64: 2, 2>, scalar_prefetch = 0 : i64, scratch_operands = 0 : i64, tpu.core_type = #tpu.core_type<tc>, window_params = [{pipeline_mode = #tpu.pipeline_mode<synchronous>, transform_indices = @transform_0, window_bounds = array<i64: 24, 32>}, {transform_indices = @transform_1, window_bounds = array<i64: 1, 32, 128>}, {pipeline_mode = #tpu.pipeline_mode<synchronous>, transform_indices = @transform_2, window_bounds = array<i64: 24, 1>}, {transform_indices = @transform_3, window_bounds = array<i64: 1, 24, 128>}]} {
    %c0 = arith.constant 0 : index
    %c0_0 = arith.constant 0 : index
    %c0_1 = arith.constant 0 : index
    %0 = vector.load %arg3[%c0, %c0_0, %c0_1] : memref<1x32x128xf32, #tpu.memory_space<vmem>>, vector<1x32x128xf32>
    %1 = vector.shape_cast %0 : vector<1x32x128xf32> to vector<32x128xf32>
    %c0_2 = arith.constant 0 : index
    %c0_3 = arith.constant 0 : index
    %2 = vector.load %arg2[%c0_2, %c0_3] : memref<24x32xf32, #tpu.memory_space<vmem>>, vector<24x32xf32>
    %cst = arith.constant dense<0.000000e+00> : vector<24x128xf32>
    %3 = tpu.matmul %2, %1, %cst {dimension_numbers = #tpu.dot_dimension_numbers<[1], [0], [0], [1], [0, 0, 1, 1], [], []>} : vector<24x32xf32>, vector<32x128xf32>, vector<24x128xf32> -> vector<24x128xf32>
    %c0_4 = arith.constant 0 : index
    %c0_5 = arith.constant 0 : index
    %4 = vector.load %arg4[%c0_4, %c0_5] : memref<24x1xf32, #tpu.memory_space<vmem>>, vector<24x1xf32>
    %5 = vector.broadcast %4 : vector<24x1xf32> to vector<24x128xf32>
    %6 = arith.addf %3, %5 : vector<24x128xf32>
    %c0_6 = arith.constant 0 : index
    %c0_7 = arith.constant 0 : index
    %c0_8 = arith.constant 0 : index
    %7 = vector.load %arg5[%c0_6, %c0_7, %c0_8] : memref<1x24x128xf32, #tpu.memory_space<vmem>>, vector<1x24x128xf32>
    %8 = vector.shape_cast %7 : vector<1x24x128xf32> to vector<24x128xf32>
    %9 = vector.shape_cast %6 : vector<24x128xf32> to vector<1x24x128xf32>
    tpu.vector_store %arg5[%c0_6, %c0_7, %c0_8], %9 {strides = array<i32>} : memref<1x24x128xf32, #tpu.memory_space<vmem>>, vector<1x24x128xf32>,
    return
  }
  func.func @transform_0(%arg0: i32, %arg1: i32) -> (i32, i32) {
    %c0_i32 = arith.constant 0 : i32
    %c0_i32_0 = arith.constant 0 : i32
    %c0_i32_1 = arith.constant 0 : i32
    return %c0_i32, %c0_i32_0 : i32, i32
  }
  func.func @transform_1(%arg0: i32, %arg1: i32) -> (i32, i32, i32) {
    %c0_i32 = arith.constant 0 : i32
    %c0_i32_0 = arith.constant 0 : i32
    return %arg0, %c0_i32, %arg1 : i32, i32, i32
  }
  func.func @transform_2(%arg0: i32, %arg1: i32) -> (i32, i32) {
    %c0_i32 = arith.constant 0 : i32
    %c0_i32_0 = arith.constant 0 : i32
    %c0_i32_1 = arith.constant 0 : i32
    return %c0_i32, %c0_i32_0 : i32, i32
  }
  func.func @transform_3(%arg0: i32, %arg1: i32) -> (i32, i32, i32) {
    %c0_i32 = arith.constant 0 : i32
    %c0_i32_0 = arith.constant 0 : i32
    return %arg0, %c0_i32, %arg1 : i32, i32, i32
  }
}

</mosaic_0001>

<llo_original>
// kernel: tpu_custom_call.1
$region0: #{tpu_custom_call.1}
  #allocation0 [shape = 'u32[]', space=smem, size = 0x4, offset = 0x4, fixed_abs, tag = 'smem constant byte address 0x4 - core index']
  #allocation1 [shape = 'u32[144,128]{1,0:T(1,128)}', space=vmem, size = 0x12000, scoped, tag = 'internal scratch']
  %s0 = inlined_call_operand.vmem [shape: f32[24,32], index: 0, kind: input, shape index: {}]
  %s1 = inlined_call_operand.hbm [shape: f32[2,32,256], index: 1, kind: input, shape index: {}]
  %s2 = inlined_call_operand.vmem [shape: f32[24,1], index: 2, kind: input, shape index: {}]
  %s3 = inlined_call_operand.hbm [shape: f32[2,24,256], index: 3, kind: output, shape index: {}]
  %s4 = sld [smem:[#allocation0]]
  $region49: #{tpu_custom_call.1} parent=0
    _
  %s6 = ssub.s32 1, %s4
  %s7 = scalar_select 0, %s6, %s4
  $region1: #{tpu_custom_call.1} parent=0
    #allocation2 [shape = 'u8[32768]{0}', space=vmem, size = 0x8000, scoped, tag = 'input window, operand 1']
    #allocation3 [shape = 's32[2]{0}', space=sflag, size = 0x8, scoped, tag = 'scoped memory for tpu_custom_call.1']
    #allocation4 [shape = 's32[2]{0}', space=sflag, size = 0x8, scoped, tag = 'scoped memory for tpu_custom_call.1']
    #allocation5 [shape = 'u8[24576]{0}', space=vmem, size = 0x6000, scoped, tag = 'output window, operand 0']
    %8 = vsyncpa [#allocation3], 0
    %s9 = scalar_lea.sflag [#allocation3], 1
    %10 = vsyncpa %s9, 0
    %11 = vsyncpa [#allocation4], 0
    %s12 = scalar_lea.sflag [#allocation4], 1
    %13 = vsyncpa %s12, 0
    loop: start=0, step=1, limit=6
    $region2: #{tpu_custom_call.1} parent=1 // loop_pre_header
      _
    $region3: #{tpu_custom_call.1} parent=1 // loop_header
      %s15 = sphi 0, %s19
      %p16 = scmp.ge.s32.totalorder %s15, 6
      %s22 = sphi 0, %s34
      %s23 = sphi 0, %s30
      %s24 = sphi 0, %s22
      %s25 = sphi 0, %s23
      %s26 = sphi 0, %s24
      %s27 = sphi 0, %s25
      %s35 = sphi 0, %s35
      %s37 = sphi 0, %s35
      %s38 = sphi 0, %s37
      %s52 = sphi 0, %s38
      %s60 = sphi 0, %s62
      %s63 = sphi 0, %s60
      %s64 = sphi 0, %s63
      %s80 = sphi 0, %s64
      %s84 = sphi 0, %s84
      %s86 = sphi 0, %s84
      %s87 = sphi 0, %s86
      %s101 = sphi 0, %s87
      %s109 = sphi 0, %s111
      %s112 = sphi 0, %s109
      %s113 = sphi 0, %s112
      %s129 = sphi 0, %s113
    $region4: #{tpu_custom_call.1} parent=1 // loop_header_branch
      %18 = sbr.rel (%p16) target = $region8
    $region5: #{tpu_custom_call.1} parent=1 // loop_body
      %s20 = ssub.s32 %s15, 1
      %s21 = ssub.s32 %s15, 2
      %s28 = sadd.s32 1, %s23
      %p29 = scmp.ge.s32.totalorder %s28, 2
      %s30 = scalar_select %p29, 0, %s28
      %s31 = sadd.s32 1, %s22
      %s32 = scalar_select %p29, %s31, %s22
      %p33 = scmp.ge.s32.totalorder %s32, 2
      %s34 = scalar_select %p33, 0, %s32
      %s36 = sadd.s32 %s35, 1
      %p39 = scmp.eq.s32.totalorder %s15, 3
      %p40 = scmp.ne.s32.totalorder %s35, %s37
      %p41 = scmp.eq.s32.totalorder %s15, 0
      %p42 = por %p40, %p41
      %p43 = scmp.ne.s32.totalorder %s35, %s37
      %p44 = scmp.eq.s32.totalorder %s20, 3
      %p45 = por %p43, %p44
      %p46 = scmp.ne.s32.totalorder %s37, %s38
      %p47 = scmp.eq.s32.totalorder %s20, 0
      %p48 = por %p46, %p47
      %p49 = scmp.ne.s32.totalorder %s37, %s38
      %p50 = scmp.eq.s32.totalorder %s21, 3
      %p51 = por %p49, %p50
      %p53 = scmp.ne.s32.totalorder %s38, %s52
      %p54 = scmp.eq.s32.totalorder %s21, 0
      %p55 = por %p53, %p54
      %s56 = ssub.s32 %s22, %s34
      %s57 = ssub.s32 %s23, %s30
      %s58 = sor.u32 %s56, %s57
      %p59 = scmp.eq.s32.totalorder %s58, 0
      %s61 = sadd.s32 %s60, 1
      %s62 = scalar_select %p59, %s60, %s61
      %p65 = pneg %p59
      %p66 = scmp.eq.s32.totalorder %s15, 3
      %p67 = por %p65, %p66
      %p68 = scmp.ne.s32.totalorder %s60, %s63
      %p69 = scmp.eq.s32.totalorder %s15, 0
      %p70 = por %p68, %p69
      %p71 = scmp.ne.s32.totalorder %s60, %s63
      %p72 = scmp.eq.s32.totalorder %s20, 3
      %p73 = por %p71, %p72
      %p74 = scmp.ne.s32.totalorder %s63, %s64
      %p75 = scmp.eq.s32.totalorder %s20, 0
      %p76 = por %p74, %p75
      %p77 = scmp.ne.s32.totalorder %s63, %s64
      %p78 = scmp.eq.s32.totalorder %s21, 3
      %p79 = por %p77, %p78
      %p81 = scmp.ne.s32.totalorder %s64, %s80
      %p82 = scmp.eq.s32.totalorder %s21, 0
      %p83 = por %p81, %p82
      %s85 = sadd.s32 %s84, 1
      %p88 = scmp.eq.s32.totalorder %s15, 3
      %p89 = scmp.ne.s32.totalorder %s84, %s86
      %p90 = scmp.eq.s32.totalorder %s15, 0
      %p91 = por %p89, %p90
      %p92 = scmp.ne.s32.totalorder %s84, %s86
      %p93 = scmp.eq.s32.totalorder %s20, 3
      %p94 = por %p92, %p93
      %p95 = scmp.ne.s32.totalorder %s86, %s87
      %p96 = scmp.eq.s32.totalorder %s20, 0
      %p97 = por %p95, %p96
      %p98 = scmp.ne.s32.totalorder %s86, %s87
      %p99 = scmp.eq.s32.totalorder %s21, 3
      %p100 = por %p98, %p99
      %p102 = scmp.ne.s32.totalorder %s87, %s101
      %p103 = scmp.eq.s32.totalorder %s21, 0
      %p104 = por %p102, %p103
      %s105 = ssub.s32 %s22, %s34
      %s106 = ssub.s32 %s23, %s30
      %s107 = sor.u32 %s105, %s106
      %p108 = scmp.eq.s32.totalorder %s107, 0
      %s110 = sadd.s32 %s109, 1
      %s111 = scalar_select %p108, %s109, %s110
      %p114 = pneg %p108
      %p115 = scmp.eq.s32.totalorder %s15, 3
      %p116 = por %p114, %p115
      %p117 = scmp.ne.s32.totalorder %s109, %s112
      %p118 = scmp.eq.s32.totalorder %s15, 0
      %p119 = por %p117, %p118
      %p120 = scmp.ne.s32.totalorder %s109, %s112
      %p121 = scmp.eq.s32.totalorder %s20, 3
      %p122 = por %p120, %p121
      %p123 = scmp.ne.s32.totalorder %s112, %s113
      %p124 = scmp.eq.s32.totalorder %s20, 0
      %p125 = por %p123, %p124
      %p126 = scmp.ne.s32.totalorder %s112, %s113
      %p127 = scmp.eq.s32.totalorder %s21, 3
      %p128 = por %p126, %p127
      %p130 = scmp.ne.s32.totalorder %s113, %s129
      %p131 = scmp.eq.s32.totalorder %s21, 0
      %p132 = por %p130, %p131
      %p133 = scmp.le.s32.totalorder 1, %s15
      %p134 = scmp.lt.s32.totalorder %s15, 5
      %p135 = pnand %p133, %p134
      %p136 = pneg %p135
      // Predicated region
      $region9: #{tpu_custom_call.1} parent=5 // pred_check
        _
      $region10: #{tpu_custom_call.1} parent=5 // pred_check_branch
        %138 = sbr.rel (%p135) target = $region12
      $region11: #{tpu_custom_call.1} parent=5 // pred_region
        %s139 = ssub.s32 %s15, 1
        // Predicated region
        $region13: #{tpu_custom_call.1} parent=11 // pred_check
          %p140 = pneg %p48
        $region14: #{tpu_custom_call.1} parent=11 // pred_check_branch
          %142 = sbr.rel (%p140) target = $region16
        $region15: #{tpu_custom_call.1} parent=11 // pred_region
          _
        $region16: #{tpu_custom_call.1} parent=11 // pred_fallthru
          _
        // Predicated region
        $region17: #{tpu_custom_call.1} parent=11 // pred_check
          %p143 = pneg %p97
        $region18: #{tpu_custom_call.1} parent=11 // pred_check_branch
          %145 = sbr.rel (%p143) target = $region20
        $region19: #{tpu_custom_call.1} parent=11 // pred_region
          _
        $region20: #{tpu_custom_call.1} parent=11 // pred_fallthru
          _
      $region12: #{tpu_custom_call.1} parent=5 // pred_fallthru
        _
      %p146 = scmp.lt.s32.totalorder %s15, 4
      // Predicated region
      $region21: #{tpu_custom_call.1} parent=5 // pred_check
        %p147 = pneg %p146
      $region22: #{tpu_custom_call.1} parent=5 // pred_check_branch
        %149 = sbr.rel (%p147) target = $region24
      $region23: #{tpu_custom_call.1} parent=5 // pred_region
        // Predicated region
        $region25: #{tpu_custom_call.1} parent=23 // pred_check
          %p150 = pneg %p70
        $region26: #{tpu_custom_call.1} parent=23 // pred_check_branch
          %152 = sbr.rel (%p150) target = $region28
        $region27: #{tpu_custom_call.1} parent=23 // pred_region
          %s153 = sand.u32 %s60, 1
          %s154 = scalar_lea.sflag [#allocation3], %s153
          %s155 = sand.u32 %s60, 1
          %s156 = smul.addr %s155, 32
          %s157 = scalar_lea.vmem [#allocation2], %s156
          %s159 = ssub.s32 512, 512
          %160 = vsyncadd %s154, %s159
          %s161 = smul.addr %s22, 8
          %s162 = sadd.s32 %s23, %s161
          %s163 = smul.addr %s162, 128
          %s164 = scalar_lea.hbm %s1, %s163
          %s165 = sshll.u32 %s157, 4
          %s166 = int_to_ptr.vmem [resolvable:$true] %s165
          %171 = dma.hbm_to_vmem [thread:$0]  %s164, 512, %s166, %s154, 256, 128, 8
        $region28: #{tpu_custom_call.1} parent=23 // pred_fallthru
          _
      $region24: #{tpu_custom_call.1} parent=5 // pred_fallthru
        _
      %p172 = scmp.le.s32.totalorder 1, %s15
      %p173 = scmp.lt.s32.totalorder %s15, 5
      %p174 = pnand %p172, %p173
      %p175 = pneg %p174
      // Predicated region
      $region29: #{tpu_custom_call.1} parent=5 // pred_check
        _
      $region30: #{tpu_custom_call.1} parent=5 // pred_check_branch
        %177 = sbr.rel (%p174) target = $region32
      $region31: #{tpu_custom_call.1} parent=5 // pred_region
        %s178 = ssub.s32 %s15, 1
        %s179 = sand.u32 %s63, 1
        %s180 = scalar_lea.sflag [#allocation3], %s179
        %s181 = sand.u32 %s63, 1
        %s182 = smul.addr %s181, 32
        %s183 = scalar_lea.vmem [#allocation2], %s182
        // Predicated region
        $region33: #{tpu_custom_call.1} parent=31 // pred_check
          %p184 = pneg %p76
        $region34: #{tpu_custom_call.1} parent=31 // pred_check_branch
          %186 = sbr.rel (%p184) target = $region36
        $region35: #{tpu_custom_call.1} parent=31 // pred_region
          %187 = dma.done %s180, 512
        $region36: #{tpu_custom_call.1} parent=31 // pred_fallthru
          _
        %p188 = pneg %p48
        %p189 = pneg %p45
        %s190 = sand.u32 %s63, 1
        %s191 = scalar_lea.sflag [#allocation3], %s190
        %s192 = sand.u32 %s63, 1
        %s193 = smul.addr %s192, 32
        %s194 = scalar_lea.vmem [#allocation2], %s193
        %p195 = pneg %p76
        %p196 = pneg %p73
        %p197 = pneg %p97
        %p198 = pneg %p94
        %p199 = pneg %p125
        %p200 = pneg %p122
        %s201 = sand.u32 %s112, 1
        %s202 = scalar_lea.sflag [#allocation4], %s201
        %s203 = sand.u32 %s112, 1
        %s204 = smul.addr %s203, 24
        %s205 = scalar_lea.vmem [#allocation5], %s204
        %v206 = vld [vmem:[%s183] sm:$0xff]
        %v207 = vld [vmem:[%s183 + $0x8] sm:$0xff]
        %v208 = vld [vmem:[%s183 + $0x10] sm:$0xff]
        %v209 = vld [vmem:[%s183 + $0x18] sm:$0xff]
        %v210 = vld [vmem:[%s0] sm:$0xff]
        %v211 = vld [vmem:[%s0 + $0x8] sm:$0xff]
        %v212 = vld [vmem:[%s0 + $0x10] sm:$0xff]
        %v213 = vld [vmem:[%s2] sm:$0xff]
        %v214 = vld [vmem:[%s2 + $0x8] sm:$0xff]
        %v215 = vld [vmem:[%s2 + $0x10] sm:$0xff]
        %217 = vset.pattern.permute.xlu0 0
        %218 = vperm.xlu0 %217, %v213
        %v219 = vpop.permute.xlu0 %218
        %222 = vset.pattern.permute.xlu0 0
        %223 = vperm.xlu0 %222, %v214
        %v224 = vpop.permute.xlu0 %223
        %227 = vset.pattern.permute.xlu0 0
        %228 = vperm.xlu0 %227, %v215
        %v229 = vpop.permute.xlu0 %228
        %vm231 = vcmask 261120
        %v233 = vsel %vm231, %v210, 0
        %v236 = vsel %vm231, %v211, 0
        %v239 = vsel %vm231, %v212, 0
        %241 = vmatprep.subr.mxu0 0.0
        %242 = vmatpush1.msra.mxu0 %v206
        %243 = vmatprep.subr.mxu0 0.0
        %244 = vmatpush1.msra.mxu0 %v207
        %245 = vmatprep.subr.mxu0 0.0
        %246 = vmatpush1.msra.mxu0 %v208
        %247 = vmatprep.subr.mxu0 0.0
        %248 = vmatpush1.msra.mxu0 %v209
        %249 = vmatprep.subr.mxu0 0.0
        %250 = vmatpush1.msra.mxu0 0.0
        %251 = vmatprep.subr.mxu0 0.0
        %252 = vmatpush1.msra.mxu0 0.0
        %253 = vmatprep.subr.mxu0 0.0
        %254 = vmatpush1.msra.mxu0 0.0
        %255 = vmatprep.subr.mxu0 0.0
        %256 = vmatpush1.msra.mxu0 0.0
        %257 = vmatprep.subr.mxu0 0.0
        %258 = vmatpush1.msra.mxu0 0.0
        %259 = vmatprep.subr.mxu0 0.0
        %260 = vmatpush1.msra.mxu0 0.0
        %261 = vmatprep.subr.mxu0 0.0
        %262 = vmatpush1.msra.mxu0 0.0
        %263 = vmatprep.subr.mxu0 0.0
        %264 = vmatpush1.msra.mxu0 0.0
        %265 = vmatprep.subr.mxu0 0.0
        %266 = vmatpush1.msra.mxu0 0.0
        %267 = vmatprep.subr.mxu0 0.0
        %268 = vmatpush1.msra.mxu0 0.0
        %269 = vmatprep.subr.mxu0 0.0
        %270 = vmatpush1.msra.mxu0 0.0
        %271 = vmatprep.subr.mxu0 0.0
        %272 = vmatpush1.msra.mxu0 0.0
        %273 = vmatprep.subr.mxu0 0.0
        %274 = vmatpush1.msra.mxu0 0.0
        %275 = vmatprep.subr.mxu0 0.0
        %276 = vmatpush1.msra.mxu0 0.0
        %277 = vmatprep.subr.mxu0 0.0
        %278 = vmatpush1.msra.mxu0 0.0
        %279 = vmatprep.subr.mxu0 0.0
        %280 = vmatpush1.msra.mxu0 0.0
        %281 = vmatprep.subr.mxu0 0.0
        %282 = vmatpush1.msra.mxu0 0.0
        %283 = vmatprep.subr.mxu0 0.0
        %284 = vmatpush1.msra.mxu0 0.0
        %285 = vmatprep.subr.mxu0 0.0
        %286 = vmatpush1.msra.mxu0 0.0
        %287 = vmatprep.subr.mxu0 0.0
        %288 = vmatpush1.msra.mxu0 0.0
        %289 = vmatprep.subr.mxu0 0.0
        %290 = vmatpush1.msra.mxu0 0.0
        %291 = vmatprep.subr.mxu0 0.0
        %292 = vmatpush1.msra.mxu0 0.0
        %293 = vmatprep.subr.mxu0 0.0
        %294 = vmatpush1.msra.mxu0 0.0
        %295 = vmatprep.subr.mxu0 0.0
        %296 = vmatpush1.msra.mxu0 0.0
        %297 = vmatprep.subr.mxu0 0.0
        %298 = vmatpush1.msra.mxu0 0.0
        %299 = vmatprep.subr.mxu0 0.0
        %300 = vmatpush1.msra.mxu0 0.0
        %301 = vmatprep.subr.mxu0 0.0
        %302 = vmatpush1.msra.mxu0 0.0
        %303 = vmatprep.subr.mxu0 0.0
        %304 = vmatpush1.msra.mxu0 0.0
        %305 = vmatprep.mubr.f32.mxu0 0.0
        %306 = vmatmul.mubr.f32.gmra.mrb[0].mxu0 %v233
        %v307 = vpop.f32.mrb[0].mxu0
        %v308 = vadd.f32 %v219, %v307
        %v309 = vpop.f32.mrb[0].mxu0
        %310 = vmatprep.mubr.f32.mxu0 0.0
        %311 = vmatmul.mubr.f32.gmra.mrb[0].mxu0 %v236
        %v312 = vpop.f32.mrb[0].mxu0
        %v313 = vadd.f32 %v224, %v312
        %v314 = vpop.f32.mrb[0].mxu0
        %315 = vmatprep.mubr.f32.mxu0 0.0
        %316 = vmatmul.mubr.f32.gmra.mrb[0].mxu0 %v239
        %v317 = vpop.f32.mrb[0].mxu0
        %v318 = vadd.f32 %v229, %v317
        %v319 = vpop.f32.mrb[0].mxu0
        %320 = vdwg.mxu0
        %321 = vst [vmem:[%s205] sm:$0xff] %v308
        %322 = vst [vmem:[%s205 + $0x8] sm:$0xff] %v313
        %323 = vst [vmem:[%s205 + $0x10] sm:$0xff] %v318
        %s324 = sand.u32 %s112, 1
        %s325 = scalar_lea.sflag [#allocation4], %s324
        %s326 = sand.u32 %s112, 1
        %s327 = smul.addr %s326, 24
        %s328 = scalar_lea.vmem [#allocation5], %s327
        // Predicated region
        $region37: #{tpu_custom_call.1} parent=31 // pred_check
          %p329 = pneg %p122
        $region38: #{tpu_custom_call.1} parent=31 // pred_check_branch
          %331 = sbr.rel (%p329) target = $region40
        $region39: #{tpu_custom_call.1} parent=31 // pred_region
          %s333 = ssub.s32 384, 384
          %334 = vsyncadd %s325, %s333
          %s335 = smul.addr %s24, 6
          %s336 = sadd.s32 %s25, %s335
          %s337 = smul.addr %s336, 128
          %s338 = scalar_lea.hbm %s3, %s337
          %s339 = sshll.u32 %s328, 4
          %s340 = int_to_ptr.vmem [resolvable:$true] %s339
          %345 = dma.vmem_to_hbm [thread:$0]  %s340, 384, %s338, %s325, 128, 256, 8
        $region40: #{tpu_custom_call.1} parent=31 // pred_fallthru
          _
      $region32: #{tpu_custom_call.1} parent=5 // pred_fallthru
        _
      %p346 = scmp.le.s32.totalorder 2, %s15
      // Predicated region
      $region41: #{tpu_custom_call.1} parent=5 // pred_check
        %p347 = pneg %p346
      $region42: #{tpu_custom_call.1} parent=5 // pred_check_branch
        %349 = sbr.rel (%p347) target = $region44
      $region43: #{tpu_custom_call.1} parent=5 // pred_region
        %s350 = ssub.s32 %s15, 2
        // Predicated region
        $region45: #{tpu_custom_call.1} parent=43 // pred_check
          %p351 = pneg %p128
        $region46: #{tpu_custom_call.1} parent=43 // pred_check_branch
          %353 = sbr.rel (%p351) target = $region48
        $region47: #{tpu_custom_call.1} parent=43 // pred_region
          %s354 = sand.u32 %s113, 1
          %s355 = scalar_lea.sflag [#allocation4], %s354
          %s356 = sand.u32 %s113, 1
          %s357 = smul.addr %s356, 24
          %s358 = scalar_lea.vmem [#allocation5], %s357
          %359 = dma.done %s355, 384
        $region48: #{tpu_custom_call.1} parent=43 // pred_fallthru
          _
      $region44: #{tpu_custom_call.1} parent=5 // pred_fallthru
        _
    $region6: #{tpu_custom_call.1} parent=1 // loop_footer
      %s19 = sadd.s32 1, %s15
    $region7: #{tpu_custom_call.1} parent=1 // loop_footer_branch
      %14 = sbr.rel target = $region3
    $region8: #{tpu_custom_call.1} parent=1 // loop_exit
      _
    %360 = vsyncpa [#allocation3], 1
    %s361 = scalar_lea.sflag [#allocation3], 1
    %362 = vsyncpa %s361, 1
    %363 = vsyncpa [#allocation4], 1
    %s364 = scalar_lea.sflag [#allocation4], 1
    %365 = vsyncpa %s364, 1

</llo_original>
